<compile_context>
chip_gen: v7x
topology: tpu7x:2x2x1
jax: 0.10.0
libtpu: 0.0.40
codegen_flags: <defaults>
</compile_context>

<pallas_src>
import functools

import numpy as np
import jax
import jax.numpy as jnp
from jax.experimental import pallas as pl
from jax.experimental.pallas import tpu as pltpu

_TARGET_F32_BLOCK_BYTES = 4 * 1024 * 1024     # ~4 MiB (f32-equivalent) per grid step
_VMEM_LIMIT_BYTES = 48 * 1024 * 1024          # fits v5e/v6e (128 MiB) and v7x (64 MiB)


@functools.lru_cache(maxsize=None)
def _roll_matches_jnp():
    """Probe (once) whether pltpu.roll follows jnp.roll's sign convention.

    jnp.roll(x, s)[i] == x[(i - s) % n].  The wrap masks below depend on the
    direction, so we measure it instead of assuming it.
    """
    n = 256

    def kernel(x_ref, o_ref):
        o_ref[...] = pltpu.roll(x_ref[...], shift=1, axis=1)

    x = jnp.arange(n, dtype=jnp.float32).reshape(1, n)
    y = pl.pallas_call(kernel, out_shape=jax.ShapeDtypeStruct((1, n), jnp.float32))(x)
    return bool(jax.device_get(y[0, 0]) == n - 1)


def _make_tv_kernel(nc_total, tile_nc, hw, shift_y, shift_x, num_tiles):
    def kernel(x_ref, m_ref, out_ref, acc_y, acc_x):
        k = pl.program_id(0)

        @pl.when(k == 0)
        def _init():
            acc_y[...] = jnp.zeros_like(acc_y)
            acc_x[...] = jnp.zeros_like(acc_x)

        x = x_ref[...].astype(jnp.float32)                     # (tile_nc, hw)

        # rolled[i] == x[(i + w) % hw]  /  x[(i + 1) % hw]  (direction probed).
        # Rolls run on the XLU; |diff| on the VPU; no slice materializations.
        ady = jnp.abs(pltpu.roll(x, shift=shift_y, axis=1) - x)
        adx = jnp.abs(pltpu.roll(x, shift=shift_x, axis=1) - x)

        # {0,1} masks zero the circular-wrap positions (last image row for y,
        # last image column for x); folded into the per-row lane reduction.
        ymask = m_ref[0:1, :]                                  # (1, hw)
        xmask = m_ref[1:2, :]
        sy = jnp.sum(ady * ymask, axis=1, keepdims=True)       # (tile_nc, 1)
        sx = jnp.sum(adx * xmask, axis=1, keepdims=True)

        # Ragged final tile: rows past the end of the array carry garbage.
        # Zero their per-row sums -- O(tile_nc) work instead of a full-tile mask.
        valid_rows = nc_total - k * tile_nc
        rows = jax.lax.broadcasted_iota(jnp.int32, (tile_nc, 1), 0)
        keep = rows < valid_rows
        acc_y[...] += jnp.where(keep, sy, 0.0)
        acc_x[...] += jnp.where(keep, sx, 0.0)

        @pl.when(k == num_tiles - 1)
        def _finalize():
            out_ref[0, 0] = jnp.sum(acc_y[...])
            out_ref[0, 1] = jnp.sum(acc_x[...])

    return kernel


def _pick_tile_nc(nc, hw):
    rows = max(1, _TARGET_F32_BLOCK_BYTES // (hw * 4))
    if rows >= nc:
        return nc
    tile = (rows // 8) * 8
    if tile < 8:
        tile = 8   # TODO(synk): H/W-tile huge single images instead of oversizing here.
    return min(tile, nc)


def _tv_abs_diff_sums(x2, h, w):
    """x2: (N*C, H*W). Returns f32 (1, 2) = [[sum|d/dH|, sum|d/dW|]] over valid diffs."""
    nc, hw = x2.shape
    tile_nc = _pick_tile_nc(nc, hw)
    num_tiles = pl.cdiv(nc, tile_nc)

    # Effective shifts so that rolled[i] == x[(i + delta) % hw].
    jnp_conv = _roll_matches_jnp()

    def eff_shift(delta):
        d = delta % hw
        return (hw - d) % hw if jnp_conv else d

    shift_y = eff_shift(w)   # neighbour one image row below
    shift_x = eff_shift(1)   # neighbour one pixel to the right

    idx = np.arange(hw)
    masks = jnp.asarray(np.stack([
        (idx < (h - 1) * w).astype(np.float32),        # y: drop wrap (last row)
        ((idx % w) != (w - 1)).astype(np.float32),     # x: drop wrap (last column)
    ]))                                                # (2, hw) f32, DMA'd once

    kernel = _make_tv_kernel(nc, tile_nc, hw, shift_y, shift_x, num_tiles)

    return pl.pallas_call(
        kernel,
        out_shape=jax.ShapeDtypeStruct((1, 2), jnp.float32),
        grid=(num_tiles,),
        in_specs=[
            pl.BlockSpec((tile_nc, hw), lambda k: (k, 0)),
            pl.BlockSpec((2, hw), lambda k: (0, 0)),
        ],
        out_specs=pl.BlockSpec((1, 2), lambda k: (0, 0), memory_space=pltpu.SMEM),
        scratch_shapes=[
            pltpu.VMEM((tile_nc, 1), jnp.float32),
            pltpu.VMEM((tile_nc, 1), jnp.float32),
        ],
        compiler_params=pltpu.CompilerParams(
            dimension_semantics=("arbitrary",),
            vmem_limit_bytes=_VMEM_LIMIT_BYTES,
        ),
    )(x2, masks)


def weighted_tv_loss(pred, weight=None, loss_weight=1.0):
    """Forward pass of WeightedTVLoss(loss_weight).forward(pred, weight)."""
    if weight is not None:
        # TODO(synk): elementwise-weighted path (weight tensor + weight-sum
        # normalization from weighted_loss) not implemented in Pallas.
        raise NotImplementedError("WeightedTVLoss with weight != None is not implemented")
    n, c, h, w = pred.shape
    nc = n * c
    sums = _tv_abs_diff_sums(pred.reshape(nc, h * w), h, w)
    count_y = nc * (h - 1) * w
    count_x = nc * h * (w - 1)
    y_diff = loss_weight * sums[0, 0] / jnp.float32(count_y)
    x_diff = loss_weight * sums[0, 1] / jnp.float32(count_x)
    return x_diff + y_diff


def _reference(pred, loss_weight=1.0):
    p = pred.astype(jnp.float32)
    y_diff = loss_weight * jnp.mean(jnp.abs(p[:, :, 1:, :] - p[:, :, :-1, :]))
    x_diff = loss_weight * jnp.mean(jnp.abs(p[:, :, :, 1:] - p[:, :, :, :-1]))
    return x_diff + y_diff


if __name__ == "__main__":
    key = jax.random.PRNGKey(0)

    # Case 1: small NCHW input matching the module's expected use.
    key, k1 = jax.random.split(key)
    pred = jax.random.normal(k1, (2, 4, 16, 16), dtype=jnp.float32)
    loss = jax.block_until_ready(weighted_tv_loss(pred, loss_weight=1.0))
    ref = _reference(pred, loss_weight=1.0)
    assert jnp.allclose(loss, ref, rtol=1e-5, atol=1e-6), (loss, ref)

    # Case 2: larger input exercising multi-tile streaming and the ragged
    # final tile (N*C = 20, tile_nc = 16 -> 2 tiles, last tile 4 valid rows).
    key, k2 = jax.random.split(key)
    pred2 = jax.random.normal(k2, (4, 5, 256, 256), dtype=jnp.float32)
    loss2 = jax.block_until_ready(weighted_tv_loss(pred2, loss_weight=0.5))
    ref2 = _reference(pred2, loss_weight=0.5)
    assert jnp.allclose(loss2, ref2, rtol=1e-3, atol=1e-5), (loss2, ref2)

    # Case 3: bf16 input streamed at half the HBM bytes, f32 math in-kernel.
    key, k3 = jax.random.split(key)
    pred3 = jax.random.normal(k3, (2, 4, 16, 16),
                              dtype=jnp.float32).astype(jnp.bfloat16)
    loss3 = jax.block_until_ready(weighted_tv_loss(pred3, loss_weight=1.0))
    ref3 = _reference(pred3, loss_weight=1.0)
    assert jnp.allclose(loss3, ref3, rtol=1e-4, atol=1e-4), (loss3, ref3)

    # Case 4: awkward spatial sizes (H*W not a multiple of 128, W not a power
    # of two) to exercise the boundary masks and non-aligned lane extent.
    key, k4 = jax.random.split(key)
    pred4 = jax.random.normal(k4, (1, 3, 24, 40), dtype=jnp.float32)
    loss4 = jax.block_until_ready(weighted_tv_loss(pred4, loss_weight=2.0))
    ref4 = _reference(pred4, loss_weight=2.0)
    assert jnp.allclose(loss4, ref4, rtol=1e-5, atol=1e-6), (loss4, ref4)

    print("KERNEL_OK")
</pallas_src>

<mosaic_0001>
module attributes {stable_mosaic.version = 11 : i64} {
  func.func @kernel(%arg0: memref<1x256xf32, #tpu.memory_space<vmem>>, %arg1: memref<1x256xf32, #tpu.memory_space<vmem>>) attributes {dimension_semantics = [], scalar_prefetch = 0 : i64, scratch_operands = 0 : i64, tpu.core_type = #tpu.core_type<tc>} {
    %c0 = arith.constant 0 : index
    %c0_0 = arith.constant 0 : index
    %0 = vector.load %arg0[%c0, %c0_0] : memref<1x256xf32, #tpu.memory_space<vmem>>, vector<1x256xf32>
    %c1_i32 = arith.constant 1 : i32
    %1 = tpu.dynamic_rotate %0 by %c1_i32 dim 1 : vector<1x256xf32>, i32 -> vector<1x256xf32>
    %c0_1 = arith.constant 0 : index
    %c0_2 = arith.constant 0 : index
    %2 = vector.load %arg1[%c0_1, %c0_2] : memref<1x256xf32, #tpu.memory_space<vmem>>, vector<1x256xf32>
    tpu.vector_store %arg1[%c0_1, %c0_2], %1 {strides = array<i32>} : memref<1x256xf32, #tpu.memory_space<vmem>>, vector<1x256xf32>,
    return
  }
}

</mosaic_0001>

<llo_original>
// kernel: tpu_custom_call.1
$region0: #{tpu_custom_call.1}
  #allocation0 [shape = 'u32[]', space=smem, size = 0x4, offset = 0x4, fixed_abs, tag = 'smem constant byte address 0x4 - core index']
  #allocation1 [shape = 'u32[144,128]{1,0:T(1,128)}', space=vmem, size = 0x12000, scoped, tag = 'internal scratch']
  %s0 = inlined_call_operand.hbm [shape: f32[1,256], index: 0, kind: input, shape index: {}]
  %s1 = inlined_call_operand.hbm [shape: f32[1,256], index: 1, kind: output, shape index: {}]
  %s2 = sld [smem:[#allocation0]]
  $region18: #{tpu_custom_call.1} parent=0
    _
  %s4 = ssub.s32 1, %s2
  %s5 = scalar_select 0, %s4, %s2
  $region1: #{tpu_custom_call.1} parent=0
    #allocation2 [shape = 'u8[1024]{0}', space=vmem, size = 0x400, scoped, tag = 'input window, operand 0, single buffered']
    #allocation3 [shape = 's32[1]{0}', space=sflag, size = 0x4, scoped, tag = 'scoped memory for tpu_custom_call.1']
    #allocation4 [shape = 's32[1]{0}', space=sflag, size = 0x4, scoped, tag = 'scoped memory for tpu_custom_call.1']
    #allocation5 [shape = 'u8[1024]{0}', space=vmem, size = 0x400, scoped, tag = 'output window, operand 0, single buffered']
    %6 = vsyncpa [#allocation3], 0
    %7 = vsyncpa [#allocation4], 0
    // Predicated region
    $region2: #{tpu_custom_call.1} parent=1 // pred_check
      _
    $region3: #{tpu_custom_call.1} parent=1 // pred_check_branch
      %9 = sbr.rel (0) target = $region5
    $region4: #{tpu_custom_call.1} parent=1 // pred_region
      %s11 = ssub.s32 32, 32
      %12 = vsyncadd [#allocation3], %s11
      %s14 = sshll.u32 [#allocation2], 4
      %s15 = int_to_ptr.vmem [resolvable:$true] %s14
      %17 = dma.hbm_to_vmem [thread:$0]  %s0, 32, %s15, [#allocation3]
    $region5: #{tpu_custom_call.1} parent=1 // pred_fallthru
      _
    // Predicated region
    $region6: #{tpu_custom_call.1} parent=1 // pred_check
      _
    $region7: #{tpu_custom_call.1} parent=1 // pred_check_branch
      %19 = sbr.rel (0) target = $region9
    $region8: #{tpu_custom_call.1} parent=1 // pred_region
      %20 = dma.done [#allocation3], 32
    $region9: #{tpu_custom_call.1} parent=1 // pred_fallthru
      _
    %v21 = vld [vmem:[#allocation2] sm:$0x3]
    %v23 = vlaneseq
    %v24 = vshrl.u32 %v23, 7
    %v25 = vsub.s32 0, %v24
    %v26 = vrot.slane %v21, %v25
    %v27 = vlaneseq
    %v28 = vshrl.u32 %v27, 7
    %v29 = vsub.s32 1, %v28
    %v30 = vrot.slane %v21, %v29
    %33 = vrot.lane.b32.xlu0 %v26, 1
    %v34 = vpop.permute.xlu0 %33
    %35 = vrot.lane.b32.xlu0 %v30, 1
    %v36 = vpop.permute.xlu0 %35
    %v37 = vlaneseq
    %v38 = vand.u32 %v37, 127
    %vm39 = vcmp.lt.s32.totalorder %v38, 1
    %v40 = vsel %vm39, %v34, %v36
    %v41 = vsel %vm39, %v36, %v34
    %v44 = vcombine.low %v41, %v40
    %v46 = vunpack.c.l.s4 1966171168
    %v47 = vunpack.c.0.s8 %v46
    %v48 = vlaneseq
    %v49 = vshrl.u32 %v48, 7
    %v50 = vsub.s32 %v47, %v49
    %v51 = vrot.slane %v44, %v50
    %v53 = vunpack.c.l.s4 1966171168
    %v54 = vunpack.c.0.s8 %v53
    %v55 = vlaneseq
    %v56 = vshrl.u32 %v55, 7
    %v57 = vsub.s32 %v54, %v56
    %v58 = vrot.slane %v51, %v57
    %v60 = vlaneseq
    %vm61 = vcmp.ge.s32.totalorder %v60, 0
    %vm62 = vcmp.lt.s32.totalorder %v60, 256
    %vm63 = vmand %vm61, %vm62
    %64 = vst.msk [vmem:[#allocation5] sm:$0x3] %vm63, %v58
    // Predicated region
    $region10: #{tpu_custom_call.1} parent=1 // pred_check
      _
    $region11: #{tpu_custom_call.1} parent=1 // pred_check_branch
      %66 = sbr.rel (0) target = $region13
    $region12: #{tpu_custom_call.1} parent=1 // pred_region
      %s68 = ssub.s32 32, 32
      %69 = vsyncadd [#allocation4], %s68
      %s71 = sshll.u32 [#allocation5], 4
      %s72 = int_to_ptr.vmem [resolvable:$true] %s71
      %74 = dma.vmem_to_hbm [thread:$0]  %s72, 32, %s1, [#allocation4]
    $region13: #{tpu_custom_call.1} parent=1 // pred_fallthru
      _
    // Predicated region
    $region14: #{tpu_custom_call.1} parent=1 // pred_check
      _
    $region15: #{tpu_custom_call.1} parent=1 // pred_check_branch
      %76 = sbr.rel (0) target = $region17
    $region16: #{tpu_custom_call.1} parent=1 // pred_region
      %77 = dma.done [#allocation4], 32
    $region17: #{tpu_custom_call.1} parent=1 // pred_fallthru
      _
    %78 = vsyncpa [#allocation3], 1
    %79 = vsyncpa [#allocation4], 1

</llo_original>
